<compile_context>
chip_gen: v7x
topology: tpu7x:2x2x1
jax: 0.10.0
libtpu: 0.0.40
codegen_flags: <defaults>
</compile_context>

<pallas_src>
import numpy as np
import jax
import jax.numpy as jnp
from jax import lax
from jax.experimental import pallas as pl
from jax.experimental.pallas import tpu as pltpu

DIM = 100          # the module hardcodes torch.zeros(1, 100) in calc_path
LANE = 128         # lane-pad of the embedding dim
SUBLANE = 8        # sublane-pad of the per-example path count


# ------------------------------ Pallas kernel --------------------------------
def _path_loss_kernel(cnt_ref, gamma_ref, pos_ref, neg_ref, path_ref, w_ref,
                      out_ref):
    """One grid step == one training example.

    cnt_ref  : SMEM (B,)  int32  true #paths of each example
    gamma_ref: SMEM (1,)  f32    margin
    pos_ref  : VMEM (1, LANE)       rel_emb[rel]      (lane zero-padded row)
    neg_ref  : VMEM (1, LANE)       rel_emb[rel_neg]  (lane zero-padded row)
    path_ref : VMEM (P_pad, LANE)   per-path "path tensors" (row+lane padded)
    w_ref    : VMEM (P_pad, 1)      per-path weights pr * pr_path
    out_ref  : VMEM (1, LANE)       per-example loss, broadcast across lanes
    """
    b = pl.program_id(0)
    p_pad = path_ref.shape[0]

    paths = path_ref[...]                               # (P_pad, LANE)
    pos_dis = pos_ref[...] - paths                      # (1,LANE) broadcast
    neg_dis = neg_ref[...] - paths
    # d_norm = 1 -> L1 norm along the embedding dim (zero lane-padding is exact)
    pos_n = jnp.sum(jnp.abs(pos_dis), axis=1, keepdims=True)   # (P_pad, 1)
    neg_n = jnp.sum(jnp.abs(neg_dis), axis=1, keepdims=True)   # (P_pad, 1)

    dd = gamma_ref[0] + w_ref[...] * pos_n - neg_n              # (P_pad, 1)
    # mask padded sublanes (they would otherwise add relu(gamma - ||neg||) > 0)
    rows = lax.broadcasted_iota(jnp.int32, (p_pad, 1), 0)
    mask = (rows < cnt_ref[b]).astype(jnp.float32)
    loss = jnp.sum(mask * jnp.maximum(dd, 0.0))

    out_ref[...] = jnp.broadcast_to(loss, out_ref.shape).astype(out_ref.dtype)


def _batched_path_loss_impl(rel_table, gamma, rel_ids, neg_ids, counts,
                            path_slab, weights):
    """rel_table:(R,LANE) f32 | gamma:(1,) f32 | rel_ids,neg_ids,counts:(B,) i32
       path_slab:(B,P_pad,LANE) f32 | weights:(B,P_pad) f32  ->  (B,) f32."""
    B, P_pad, _ = path_slab.shape
    # On-device gather of the positive / negative relation rows (fused in jit);
    # each is a single (1,LANE) row per example, broadcast inside the kernel.
    pos = jnp.take(rel_table, rel_ids, axis=0)[:, None, :]     # (B, 1, LANE)
    neg = jnp.take(rel_table, neg_ids, axis=0)[:, None, :]     # (B, 1, LANE)
    w3 = weights[:, :, None]                                    # (B, P_pad, 1)

    grid_spec = pltpu.PrefetchScalarGridSpec(
        num_scalar_prefetch=0,
        grid=(B,),
        in_specs=[
            pl.BlockSpec(memory_space=pltpu.MemorySpace.SMEM),               # counts
            pl.BlockSpec(memory_space=pltpu.MemorySpace.SMEM),               # gamma
            pl.BlockSpec((pl.Squeezed(), 1, LANE), lambda b: (b, 0, 0)),     # pos
            pl.BlockSpec((pl.Squeezed(), 1, LANE), lambda b: (b, 0, 0)),     # neg
            pl.BlockSpec((pl.Squeezed(), P_pad, LANE), lambda b: (b, 0, 0)), # paths
            pl.BlockSpec((pl.Squeezed(), P_pad, 1), lambda b: (b, 0, 0)),    # weights
        ],
        out_specs=pl.BlockSpec((pl.Squeezed(), 1, LANE), lambda b: (b, 0, 0)),
    )
    out = pl.pallas_call(
        _path_loss_kernel,
        out_shape=jax.ShapeDtypeStruct((B, 1, LANE), jnp.float32),
        grid_spec=grid_spec,
        compiler_params=pltpu.CompilerParams(
            dimension_semantics=("parallel",)),  # shards examples over v7x's 2 TCs
    )(counts, gamma, pos, neg, path_slab, w3)
    return out[:, 0, 0]


_batched_path_loss = jax.jit(_batched_path_loss_impl)


# ----------------------------- module equivalent ------------------------------
class PathTrainPallas:
    """JAX/Pallas equivalent of pathTrain (d_norm=1, L1)."""

    def __init__(self, entity_embedding, relation_embedding,
                 dim=DIM, d_norm=1, gamma=1.0):
        assert d_norm == 1, "kernel implements the module default d_norm=1 (L1)"
        self.dim = dim
        self.d_norm = d_norm
        self.gamma = float(gamma)
        self.gamma_arr = jnp.asarray([self.gamma], dtype=jnp.float32)

        # __init__ of the reference row-normalizes both embedding tables (L2, dim=1)
        rel_np = np.asarray(relation_embedding, dtype=np.float32)
        rel_np = rel_np / np.linalg.norm(rel_np, axis=1, keepdims=True)
        ent_np = np.asarray(entity_embedding, dtype=np.float32)
        ent_np = ent_np / np.linalg.norm(ent_np, axis=1, keepdims=True)

        # host copies drive the (inherently host-side) path-construction glue
        self._rel_np = rel_np
        self.relation_embedding = jnp.asarray(rel_np)
        self.entity_embedding = jnp.asarray(ent_np)
        self.relation_num = rel_np.shape[0]
        self.entity_num = ent_np.shape[0]

        # lane-padded device table (exact zeros past `dim`) for the in-jit gather
        rel_pad = np.zeros((self.relation_num, LANE), dtype=np.float32)
        rel_pad[:, :dim] = rel_np
        self._rel_table_padded = jnp.asarray(rel_pad)

    # --- glue: build the "path tensor" that gets subtracted in the kernel -----
    def _calc_path_sum(self, rel_path):
        # Faithful to the reference: calc_path sums relation_embedding([i]) where
        # i is the LOOP INDEX (0..len-1), not rel_path[i].
        tmp = np.zeros((self.dim,), dtype=np.float32)
        for i in range(len(rel_path)):
            tmp = tmp + self._rel_np[i]
        return tmp

    def _path_embedding(self, rel_path):
        # TODO(synk): `pathEmbedding` is an external module of unspecified
        # architecture; deterministic stand-in = mean of the path's relation
        # embeddings (same (dim,) row shape as the reference usage).
        return np.mean(self._rel_np[np.asarray(rel_path)], axis=0).astype(np.float32)

    def _build_example(self, trainset, i, e1, e2, rel, np_rng):
        """Host bookkeeping for one example.
        Returns (rel, rel_neg, path_rows (P,dim) f32, weights (P,) f32) or None."""
        if len(trainset.fb_path[i]) == 0:
            return None

        rel_neg = int(np_rng.integers(trainset.relation_num))
        while (trainset.ok.get((e1, rel_neg))
               and trainset.ok[(e1, rel_neg)].get(e2)):
            rel_neg = int(np_rng.integers(trainset.relation_num))

        path_rows, weights = [], []
        for path_id in range(len(trainset.fb_path[i])):
            rel_path = list(trainset.fb_path[i][path_id][0])
            rel_path1 = [rel_path[0], rel_path[2]] if len(rel_path) > 1 else rel_path
            if trainset.path2s.get(tuple(rel_path1)):
                s = trainset.path2s[tuple(rel_path1)]
            else:
                s = ''.join(str(r) for r in rel_path1)
                trainset.path2s[tuple(rel_path1)] = s
            s = trainset.path2s[tuple(rel_path1)]
            pr = trainset.fb_path[i][path_id][1]
            pr_path = trainset.path_confidence.get((s, rel), 0)
            pr_path = 0.99 * pr_path + 0.01

            if len(rel_path) > 1:
                if (rel_path[0], rel_path[2]) in trainset.rule2rel:
                    trainset.rules_used += 1
                    rel_integ = trainset.rule2rel[(rel_path[0], rel_path[2])][0]
                    rel_path[0] = rel_integ
                    rel_path.pop()
                    rel_path.pop()
                    path_rows.append(self._calc_path_sum(rel_path))
                else:
                    path_rows.append(self._path_embedding(rel_path))
            else:
                path_rows.append(self._calc_path_sum(rel_path))
            weights.append(pr * pr_path)

        return (rel, rel_neg,
                np.stack(path_rows, axis=0), np.asarray(weights, np.float32))

    # --- batched forward: numpy glue, then ONE jitted gather+pad+kernel call ---
    def forward_batch(self, trainset, items, np_rng):
        """items: list of (i, e1, e2, rel). Returns (len(items),) f32 losses."""
        built = [self._build_example(trainset, i, e1, e2, rel, np_rng)
                 for (i, e1, e2, rel) in items]
        losses = np.zeros((len(items),), dtype=np.float32)
        live = [k for k, b in enumerate(built) if b is not None]
        if not live:
            return jnp.asarray(losses)

        B = len(live)
        p_max = max(built[k][2].shape[0] for k in live)
        P_pad = max(SUBLANE, -(-p_max // SUBLANE) * SUBLANE)

        path_slab = np.zeros((B, P_pad, LANE), dtype=np.float32)
        weights = np.zeros((B, P_pad), dtype=np.float32)
        counts = np.zeros((B,), dtype=np.int32)
        rel_ids = np.zeros((B,), dtype=np.int32)
        neg_ids = np.zeros((B,), dtype=np.int32)
        for j, k in enumerate(live):
            rel, rel_neg, rows, ws = built[k]
            P = rows.shape[0]
            path_slab[j, :P, :self.dim] = rows
            weights[j, :P] = ws
            counts[j] = P
            rel_ids[j] = rel
            neg_ids[j] = rel_neg

        out = np.asarray(_batched_path_loss(
            self._rel_table_padded, self.gamma_arr,
            rel_ids, neg_ids, counts, path_slab, weights))
        for j, k in enumerate(live):
            losses[k] = out[j]
        return jnp.asarray(losses)

    def forward(self, trainset, i, e1, e2, rel, np_rng):
        return self.forward_batch(trainset, [(i, e1, e2, rel)], np_rng)[0]


# ----------------------------------- demo -------------------------------------
class _Trainset:
    pass


if __name__ == "__main__":
    key = jax.random.PRNGKey(0)
    k_ent, k_rel = jax.random.split(key)

    ENTITIES, RELATIONS = 32, 16
    GAMMA = 15.0   # large margin so several relu terms are active (non-trivial check)
    entity_emb = jax.random.normal(k_ent, (ENTITIES, DIM), dtype=jnp.float32)
    relation_emb = jax.random.normal(k_rel, (RELATIONS, DIM), dtype=jnp.float32)

    model = PathTrainPallas(entity_emb, relation_emb, dim=DIM, d_norm=1, gamma=GAMMA)

    # Synthetic deterministic "trainset" exercising all three forward branches:
    #   [3] / [5]      -> single-relation path (calc_path)
    #   [2, 5, 7]      -> rule hit in rule2rel (rewrite + calc_path)
    #   [1,9,4]/[4,2,8]-> no rule              (pathEmbedding + calc_path_embed)
    ts = _Trainset()
    ts.relation_num = RELATIONS
    ts.entity_num = ENTITIES
    ts.fb_path = {
        0: [([3], 0.8), ([2, 5, 7], 0.5), ([1, 9, 4], 0.3)],
        1: [([5], 0.6), ([4, 2, 8], 0.2)],
        2: [],
    }
    ts.ok = {(0, 0): {1: True}}              # forces rejection-resampling path
    ts.path2s = {}
    ts.path_confidence = {("3", 3): 0.7, ("14", 3): 0.4, ("5", 2): 0.9}
    ts.rule2rel = {(2, 7): [6]}
    ts.rules_used = 0

    np_rng = np.random.default_rng(0)        # deterministic negative sampling
    items = [(0, 0, 1, 3), (1, 2, 3, 2)]     # (i, e1, e2, rel) per example
    losses = jax.block_until_ready(model.forward_batch(ts, items, np_rng))

    # empty-path example -> 0 loss, no kernel call
    zero_loss = jax.block_until_ready(model.forward(ts, 2, 0, 1, 3, np_rng))

    # -------- independent numpy reference of the same batch --------
    rel_np = np.asarray(relation_emb, dtype=np.float32)
    rel_np = rel_np / np.linalg.norm(rel_np, axis=1, keepdims=True)

    chk_rng = np.random.default_rng(0)
    def sample_neg(e1, e2):
        r = int(chk_rng.integers(RELATIONS))
        while ts.ok.get((e1, r)) and ts.ok[(e1, r)].get(e2):
            r = int(chk_rng.integers(RELATIONS))
        return r
    neg0 = sample_neg(0, 1)
    neg1 = sample_neg(2, 3)

    def calc_path_sum(rp):   # faithful to the reference loop-index behavior
        return sum(rel_np[i] for i in range(len(rp)))

    def path_embed(rp):
        return np.mean(rel_np[np.asarray(rp)], axis=0)

    def ref_loss(rel, rel_neg, rows, ws):
        rows = np.stack(rows, axis=0)
        ws = np.asarray(ws, np.float32)
        pos_n = np.abs(rel_np[rel][None, :] - rows).sum(1)
        neg_n = np.abs(rel_np[rel_neg][None, :] - rows).sum(1)
        return float(np.sum(np.maximum(GAMMA + ws * pos_n - neg_n, 0.0)))

    ref0 = ref_loss(3, neg0,
                    [calc_path_sum([3]), calc_path_sum([6]), path_embed([1, 9, 4])],
                    [0.8 * (0.99 * 0.7 + 0.01), 0.5 * 0.01,
                     0.3 * (0.99 * 0.4 + 0.01)])
    ref1 = ref_loss(2, neg1,
                    [calc_path_sum([5]), path_embed([4, 2, 8])],
                    [0.6 * (0.99 * 0.9 + 0.01), 0.2 * 0.01])

    assert np.allclose(np.asarray(losses), np.asarray([ref0, ref1], np.float32),
                       rtol=1e-5, atol=1e-4), (np.asarray(losses), ref0, ref1)
    assert float(zero_loss) == 0.0
    print("KERNEL_OK")
</pallas_src>

<mosaic_0001>
module attributes {stable_mosaic.version = 11 : i64} {
  func.func @_path_loss_kernel(%arg0: i32, %arg1: memref<2xi32, #tpu.memory_space<smem>>, %arg2: memref<1xf32, #tpu.memory_space<smem>>, %arg3: memref<1x1x128xf32, #tpu.memory_space<vmem>>, %arg4: memref<1x1x128xf32, #tpu.memory_space<vmem>>, %arg5: memref<1x8x128xf32, #tpu.memory_space<vmem>>, %arg6: memref<1x8x1xf32, #tpu.memory_space<vmem>>, %arg7: memref<1x1x128xf32, #tpu.memory_space<vmem>>) attributes {dimension_semantics = [#tpu.dimension_semantics<parallel>], iteration_bounds = array<i64: 2>, scalar_prefetch = 0 : i64, scratch_operands = 0 : i64, tpu.core_type = #tpu.core_type<tc>, window_params = [{transform_indices = @transform_0, window_bounds = array<i64: 2>}, {transform_indices = @transform_1, window_bounds = array<i64: 1>}, {transform_indices = @transform_2, window_bounds = array<i64: 1, 1, 128>}, {transform_indices = @transform_3, window_bounds = array<i64: 1, 1, 128>}, {transform_indices = @transform_4, window_bounds = array<i64: 1, 8, 128>}, {transform_indices = @transform_5, window_bounds = array<i64: 1, 8, 1>}, {transform_indices = @transform_6, window_bounds = array<i64: 1, 1, 128>}]} {
    %c0 = arith.constant 0 : index
    %c0_0 = arith.constant 0 : index
    %c0_1 = arith.constant 0 : index
    %0 = vector.load %arg5[%c0, %c0_0, %c0_1] : memref<1x8x128xf32, #tpu.memory_space<vmem>>, vector<1x8x128xf32>
    %1 = vector.shape_cast %0 : vector<1x8x128xf32> to vector<8x128xf32>
    %c0_2 = arith.constant 0 : index
    %c0_3 = arith.constant 0 : index
    %c0_4 = arith.constant 0 : index
    %2 = vector.load %arg3[%c0_2, %c0_3, %c0_4] : memref<1x1x128xf32, #tpu.memory_space<vmem>>, vector<1x1x128xf32>
    %3 = vector.shape_cast %2 : vector<1x1x128xf32> to vector<1x128xf32>
    %4 = vector.broadcast %3 : vector<1x128xf32> to vector<8x128xf32>
    %5 = arith.subf %4, %1 : vector<8x128xf32>
    %c0_5 = arith.constant 0 : index
    %c0_6 = arith.constant 0 : index
    %c0_7 = arith.constant 0 : index
    %6 = vector.load %arg4[%c0_5, %c0_6, %c0_7] : memref<1x1x128xf32, #tpu.memory_space<vmem>>, vector<1x1x128xf32>
    %7 = vector.shape_cast %6 : vector<1x1x128xf32> to vector<1x128xf32>
    %8 = vector.broadcast %7 : vector<1x128xf32> to vector<8x128xf32>
    %9 = arith.subf %8, %1 : vector<8x128xf32>
    %10 = math.absf %5 : vector<8x128xf32>
    %cst = arith.constant dense<0.000000e+00> : vector<8xf32>
    %11 = vector.multi_reduction <add>, %10, %cst [1] : vector<8x128xf32> to vector<8xf32>
    %12 = vector.shape_cast %11 : vector<8xf32> to vector<8x1xf32>
    %13 = math.absf %9 : vector<8x128xf32>
    %cst_8 = arith.constant dense<0.000000e+00> : vector<8xf32>
    %14 = vector.multi_reduction <add>, %13, %cst_8 [1] : vector<8x128xf32> to vector<8xf32>
    %15 = vector.shape_cast %14 : vector<8xf32> to vector<8x1xf32>
    %c0_9 = arith.constant 0 : index
    %16 = memref.load %arg2[%c0_9] : memref<1xf32, #tpu.memory_space<smem>>
    %c0_10 = arith.constant 0 : index
    %c0_11 = arith.constant 0 : index
    %c0_12 = arith.constant 0 : index
    %17 = vector.load %arg6[%c0_10, %c0_11, %c0_12] : memref<1x8x1xf32, #tpu.memory_space<vmem>>, vector<1x8x1xf32>
    %18 = vector.shape_cast %17 : vector<1x8x1xf32> to vector<8x1xf32>
    %19 = arith.mulf %18, %12 : vector<8x1xf32>
    %20 = vector.broadcast %16 : f32 to vector<8x1xf32>
    %21 = arith.addf %20, %19 : vector<8x1xf32>
    %22 = arith.subf %21, %15 : vector<8x1xf32>
    %23 = tpu.iota {dimensions = array<i32: 0>} : vector<8x1xi32>
    %24 = arith.index_cast %arg0 : i32 to index
    %25 = memref.load %arg1[%24] : memref<2xi32, #tpu.memory_space<smem>>
    %26 = vector.broadcast %25 : i32 to vector<8x1xi32>
    %27 = arith.cmpi slt, %23, %26 : vector<8x1xi32>
    %28 = arith.extui %27 : vector<8x1xi1> to vector<8x1xi32>
    %29 = arith.sitofp %28 : vector<8x1xi32> to vector<8x1xf32>
    %cst_13 = arith.constant 0.000000e+00 : f32
    %30 = vector.broadcast %cst_13 : f32 to vector<8x1xf32>
    %31 = arith.maximumf %22, %30 : vector<8x1xf32>
    %32 = arith.mulf %29, %31 : vector<8x1xf32>
    %33 = vector.shape_cast %32 : vector<8x1xf32> to vector<1x8x1xf32>
    %cst_14 = arith.constant dense<0.000000e+00> : vector<1xf32>
    %34 = vector.multi_reduction <add>, %33, %cst_14 [1, 2] : vector<1x8x1xf32> to vector<1xf32>
    %35 = vector.shape_cast %34 : vector<1xf32> to vector<1x1x1xf32>
    %36 = vector.extract %35[0, 0, 0] : f32 from vector<1x1x1xf32>
    %37 = vector.broadcast %36 : f32 to vector<1x128xf32>
    %c0_15 = arith.constant 0 : index
    %c0_16 = arith.constant 0 : index
    %c0_17 = arith.constant 0 : index
    %38 = vector.load %arg7[%c0_15, %c0_16, %c0_17] : memref<1x1x128xf32, #tpu.memory_space<vmem>>, vector<1x1x128xf32>
    %39 = vector.shape_cast %38 : vector<1x1x128xf32> to vector<1x128xf32>
    %40 = vector.shape_cast %37 : vector<1x128xf32> to vector<1x1x128xf32>
    tpu.vector_store %arg7[%c0_15, %c0_16, %c0_17], %40 {strides = array<i32>} : memref<1x1x128xf32, #tpu.memory_space<vmem>>, vector<1x1x128xf32>,
    return
  }
  func.func @transform_0(%arg0: i32) -> i32 {
    %c0_i32 = arith.constant 0 : i32
    %c0_i32_0 = arith.constant 0 : i32
    return %c0_i32 : i32
  }
  func.func @transform_1(%arg0: i32) -> i32 {
    %c0_i32 = arith.constant 0 : i32
    %c0_i32_0 = arith.constant 0 : i32
    return %c0_i32 : i32
  }
  func.func @transform_2(%arg0: i32) -> (i32, i32, i32) {
    %c0_i32 = arith.constant 0 : i32
    %c0_i32_0 = arith.constant 0 : i32
    %c0_i32_1 = arith.constant 0 : i32
    return %arg0, %c0_i32, %c0_i32_0 : i32, i32, i32
  }
  func.func @transform_3(%arg0: i32) -> (i32, i32, i32) {
    %c0_i32 = arith.constant 0 : i32
    %c0_i32_0 = arith.constant 0 : i32
    %c0_i32_1 = arith.constant 0 : i32
    return %arg0, %c0_i32, %c0_i32_0 : i32, i32, i32
  }
  func.func @transform_4(%arg0: i32) -> (i32, i32, i32) {
    %c0_i32 = arith.constant 0 : i32
    %c0_i32_0 = arith.constant 0 : i32
    %c0_i32_1 = arith.constant 0 : i32
    return %arg0, %c0_i32, %c0_i32_0 : i32, i32, i32
  }
  func.func @transform_5(%arg0: i32) -> (i32, i32, i32) {
    %c0_i32 = arith.constant 0 : i32
    %c0_i32_0 = arith.constant 0 : i32
    %c0_i32_1 = arith.constant 0 : i32
    return %arg0, %c0_i32, %c0_i32_0 : i32, i32, i32
  }
  func.func @transform_6(%arg0: i32) -> (i32, i32, i32) {
    %c0_i32 = arith.constant 0 : i32
    %c0_i32_0 = arith.constant 0 : i32
    %c0_i32_1 = arith.constant 0 : i32
    return %arg0, %c0_i32, %c0_i32_0 : i32, i32, i32
  }
}

</mosaic_0001>

<llo_original>
// kernel: _batched_path_loss_impl.1
$region0: #{_batched_path_loss_impl.1}
  #allocation0 [shape = 'u32[]', space=smem, size = 0x4, offset = 0x4, fixed_abs, tag = 'smem constant byte address 0x4 - core index']
  #allocation1 [shape = 'u32[144,128]{1,0:T(1,128)}', space=vmem, size = 0x12000, scoped, tag = 'internal scratch']
  #allocation2 [shape = 'f32[1]{0:T(128)S(6)}', space=smem, size = 0x200, scoped, tag = 'scoped memory for _batched_path_loss_impl.1']
  %s0 = inlined_call_operand.vmem [shape: s32[2], index: 0, kind: input, shape index: {}]
  %s1 = inlined_call_operand.<no memory space> [shape: f32[1], index: 1, kind: input, shape index: {}]
  %s2 = inlined_call_operand.vmem [shape: f32[2,1,128], index: 2, kind: input, shape index: {}]
  %s3 = inlined_call_operand.vmem [shape: f32[2,1,128], index: 3, kind: input, shape index: {}]
  %s4 = inlined_call_operand.vmem [shape: f32[2,8,128], index: 4, kind: input, shape index: {}]
  %s5 = inlined_call_operand.vmem [shape: f32[2,8,1], index: 5, kind: input, shape index: {}]
  %s6 = inlined_call_operand.vmem [shape: f32[2,1,128], index: 6, kind: output, shape index: {}]
  %s7 = sld [smem:[#allocation0]]
  $region61: #{_batched_path_loss_impl.1} parent=0
    _
  %s9 = ssub.s32 1, %s7
  %s10 = scalar_select 0, %s9, %s7
  %11 = sst [smem:[#allocation2]] %s1
  $region1: #{_batched_path_loss_impl.1} parent=0
    #allocation3 [shape = 'u8[512]{0}', space=smem, size = 0x200, scoped, tag = 'input window, operand 0, single buffered']
    #allocation4 [shape = 's32[2]{0}', space=sflag, size = 0x8, scoped, tag = 'scoped memory for _batched_path_loss_impl.1']
    %12 = vsyncpa [#allocation4], 0
    loop: start=0, step=1, limit=4
    $region2: #{_batched_path_loss_impl.1} parent=1 // loop_pre_header
      _
    $region3: #{_batched_path_loss_impl.1} parent=1 // loop_header
      %s14 = sphi 0, %s18
      %p15 = scmp.ge.s32.totalorder %s14, 4
      %s22 = sphi 0, %s22
      %s24 = sphi 0, %s22
      %s25 = sphi 0, %s24
      %s39 = sphi 0, %s25
      %s43 = sphi 0, %s43
      %s45 = sphi 0, %s43
      %s46 = sphi 0, %s45
      %s60 = sphi 0, %s46
      %s66 = sphi 0, %s68
      %s69 = sphi 0, %s66
      %s70 = sphi 0, %s69
      %s86 = sphi 0, %s70
      %s92 = sphi 0, %s94
      %s95 = sphi 0, %s92
      %s96 = sphi 0, %s95
      %s112 = sphi 0, %s96
      %s118 = sphi 0, %s120
      %s121 = sphi 0, %s118
      %s122 = sphi 0, %s121
      %s138 = sphi 0, %s122
      %s144 = sphi 0, %s146
      %s147 = sphi 0, %s144
      %s148 = sphi 0, %s147
      %s164 = sphi 0, %s148
      %s170 = sphi 0, %s172
      %s173 = sphi 0, %s170
      %s174 = sphi 0, %s173
      %s190 = sphi 0, %s174
    $region4: #{_batched_path_loss_impl.1} parent=1 // loop_header_branch
      %17 = sbr.rel (%p15) target = $region8
    $region5: #{_batched_path_loss_impl.1} parent=1 // loop_body
      %s19 = ssub.s32 %s14, 1
      %s20 = ssub.s32 %s14, 2
      %s21 = sadd.s32 %s14, 1
      %s23 = sadd.s32 %s22, 1
      %p26 = scmp.eq.s32.totalorder %s14, 1
      %p27 = scmp.ne.s32.totalorder %s22, %s24
      %p28 = scmp.eq.s32.totalorder %s14, 0
      %p29 = por %p27, %p28
      %p30 = scmp.ne.s32.totalorder %s22, %s24
      %p31 = scmp.eq.s32.totalorder %s19, 1
      %p32 = por %p30, %p31
      %p33 = scmp.ne.s32.totalorder %s24, %s25
      %p34 = scmp.eq.s32.totalorder %s19, 0
      %p35 = por %p33, %p34
      %p36 = scmp.ne.s32.totalorder %s24, %s25
      %p37 = scmp.eq.s32.totalorder %s20, 1
      %p38 = por %p36, %p37
      %p40 = scmp.ne.s32.totalorder %s25, %s39
      %p41 = scmp.eq.s32.totalorder %s20, 0
      %p42 = por %p40, %p41
      %s44 = sadd.s32 %s43, 1
      %p47 = scmp.eq.s32.totalorder %s14, 1
      %p48 = scmp.ne.s32.totalorder %s43, %s45
      %p49 = scmp.eq.s32.totalorder %s14, 0
      %p50 = por %p48, %p49
      %p51 = scmp.ne.s32.totalorder %s43, %s45
      %p52 = scmp.eq.s32.totalorder %s19, 1
      %p53 = por %p51, %p52
      %p54 = scmp.ne.s32.totalorder %s45, %s46
      %p55 = scmp.eq.s32.totalorder %s19, 0
      %p56 = por %p54, %p55
      %p57 = scmp.ne.s32.totalorder %s45, %s46
      %p58 = scmp.eq.s32.totalorder %s20, 1
      %p59 = por %p57, %p58
      %p61 = scmp.ne.s32.totalorder %s46, %s60
      %p62 = scmp.eq.s32.totalorder %s20, 0
      %p63 = por %p61, %p62
      %s64 = ssub.s32 %s14, %s21
      %p65 = scmp.eq.s32.totalorder %s64, 0
      %s67 = sadd.s32 %s66, 1
      %s68 = scalar_select %p65, %s66, %s67
      %p71 = pneg %p65
      %p72 = scmp.eq.s32.totalorder %s14, 1
      %p73 = por %p71, %p72
      %p74 = scmp.ne.s32.totalorder %s66, %s69
      %p75 = scmp.eq.s32.totalorder %s14, 0
      %p76 = por %p74, %p75
      %p77 = scmp.ne.s32.totalorder %s66, %s69
      %p78 = scmp.eq.s32.totalorder %s19, 1
      %p79 = por %p77, %p78
      %p80 = scmp.ne.s32.totalorder %s69, %s70
      %p81 = scmp.eq.s32.totalorder %s19, 0
      %p82 = por %p80, %p81
      %p83 = scmp.ne.s32.totalorder %s69, %s70
      %p84 = scmp.eq.s32.totalorder %s20, 1
      %p85 = por %p83, %p84
      %p87 = scmp.ne.s32.totalorder %s70, %s86
      %p88 = scmp.eq.s32.totalorder %s20, 0
      %p89 = por %p87, %p88
      %s90 = ssub.s32 %s14, %s21
      %p91 = scmp.eq.s32.totalorder %s90, 0
      %s93 = sadd.s32 %s92, 1
      %s94 = scalar_select %p91, %s92, %s93
      %p97 = pneg %p91
      %p98 = scmp.eq.s32.totalorder %s14, 1
      %p99 = por %p97, %p98
      %p100 = scmp.ne.s32.totalorder %s92, %s95
      %p101 = scmp.eq.s32.totalorder %s14, 0
      %p102 = por %p100, %p101
      %p103 = scmp.ne.s32.totalorder %s92, %s95
      %p104 = scmp.eq.s32.totalorder %s19, 1
      %p105 = por %p103, %p104
      %p106 = scmp.ne.s32.totalorder %s95, %s96
      %p107 = scmp.eq.s32.totalorder %s19, 0
      %p108 = por %p106, %p107
      %p109 = scmp.ne.s32.totalorder %s95, %s96
      %p110 = scmp.eq.s32.totalorder %s20, 1
      %p111 = por %p109, %p110
      %p113 = scmp.ne.s32.totalorder %s96, %s112
      %p114 = scmp.eq.s32.totalorder %s20, 0
      %p115 = por %p113, %p114
      %s116 = ssub.s32 %s14, %s21
      %p117 = scmp.eq.s32.totalorder %s116, 0
      %s119 = sadd.s32 %s118, 1
      %s120 = scalar_select %p117, %s118, %s119
      %p123 = pneg %p117
      %p124 = scmp.eq.s32.totalorder %s14, 1
      %p125 = por %p123, %p124
      %p126 = scmp.ne.s32.totalorder %s118, %s121
      %p127 = scmp.eq.s32.totalorder %s14, 0
      %p128 = por %p126, %p127
      %p129 = scmp.ne.s32.totalorder %s118, %s121
      %p130 = scmp.eq.s32.totalorder %s19, 1
      %p131 = por %p129, %p130
      %p132 = scmp.ne.s32.totalorder %s121, %s122
      %p133 = scmp.eq.s32.totalorder %s19, 0
      %p134 = por %p132, %p133
      %p135 = scmp.ne.s32.totalorder %s121, %s122
      %p136 = scmp.eq.s32.totalorder %s20, 1
      %p137 = por %p135, %p136
      %p139 = scmp.ne.s32.totalorder %s122, %s138
      %p140 = scmp.eq.s32.totalorder %s20, 0
      %p141 = por %p139, %p140
      %s142 = ssub.s32 %s14, %s21
      %p143 = scmp.eq.s32.totalorder %s142, 0
      %s145 = sadd.s32 %s144, 1
      %s146 = scalar_select %p143, %s144, %s145
      %p149 = pneg %p143
      %p150 = scmp.eq.s32.totalorder %s14, 1
      %p151 = por %p149, %p150
      %p152 = scmp.ne.s32.totalorder %s144, %s147
      %p153 = scmp.eq.s32.totalorder %s14, 0
      %p154 = por %p152, %p153
      %p155 = scmp.ne.s32.totalorder %s144, %s147
      %p156 = scmp.eq.s32.totalorder %s19, 1
      %p157 = por %p155, %p156
      %p158 = scmp.ne.s32.totalorder %s147, %s148
      %p159 = scmp.eq.s32.totalorder %s19, 0
      %p160 = por %p158, %p159
      %p161 = scmp.ne.s32.totalorder %s147, %s148
      %p162 = scmp.eq.s32.totalorder %s20, 1
      %p163 = por %p161, %p162
      %p165 = scmp.ne.s32.totalorder %s148, %s164
      %p166 = scmp.eq.s32.totalorder %s20, 0
      %p167 = por %p165, %p166
      %s168 = ssub.s32 %s14, %s21
      %p169 = scmp.eq.s32.totalorder %s168, 0
      %s171 = sadd.s32 %s170, 1
      %s172 = scalar_select %p169, %s170, %s171
      %p175 = pneg %p169
      %p176 = scmp.eq.s32.totalorder %s14, 1
      %p177 = por %p175, %p176
      %p178 = scmp.ne.s32.totalorder %s170, %s173
      %p179 = scmp.eq.s32.totalorder %s14, 0
      %p180 = por %p178, %p179
      %p181 = scmp.ne.s32.totalorder %s170, %s173
      %p182 = scmp.eq.s32.totalorder %s19, 1
      %p183 = por %p181, %p182
      %p184 = scmp.ne.s32.totalorder %s173, %s174
      %p185 = scmp.eq.s32.totalorder %s19, 0
      %p186 = por %p184, %p185
      %p187 = scmp.ne.s32.totalorder %s173, %s174
      %p188 = scmp.eq.s32.totalorder %s20, 1
      %p189 = por %p187, %p188
      %p191 = scmp.ne.s32.totalorder %s174, %s190
      %p192 = scmp.eq.s32.totalorder %s20, 0
      %p193 = por %p191, %p192
      %p194 = scmp.le.s32.totalorder 1, %s14
      %p195 = scmp.lt.s32.totalorder %s14, 3
      %p196 = pnand %p194, %p195
      %p197 = pneg %p196
      // Predicated region
      $region9: #{_batched_path_loss_impl.1} parent=5 // pred_check
        _
      $region10: #{_batched_path_loss_impl.1} parent=5 // pred_check_branch
        %199 = sbr.rel (%p196) target = $region12
      $region11: #{_batched_path_loss_impl.1} parent=5 // pred_region
        %s200 = ssub.s32 %s14, 1
        // Predicated region
        $region13: #{_batched_path_loss_impl.1} parent=11 // pred_check
          %p201 = pneg %p35
        $region14: #{_batched_path_loss_impl.1} parent=11 // pred_check_branch
          %203 = sbr.rel (%p201) target = $region16
        $region15: #{_batched_path_loss_impl.1} parent=11 // pred_region
          %s205 = ssub.s32 16, 16
          %206 = vsyncadd [#allocation4], %s205
          %s208 = sshll.u32 %s0, 4
          %s209 = int_to_ptr.vmem [resolvable:$true] %s208
          %211 = dma.vmem_to_smem %s209, 16, [#allocation3], [#allocation4]
        $region16: #{_batched_path_loss_impl.1} parent=11 // pred_fallthru
          _
        // Predicated region
        $region17: #{_batched_path_loss_impl.1} parent=11 // pred_check
          %p212 = pneg %p56
        $region18: #{_batched_path_loss_impl.1} parent=11 // pred_check_branch
          %214 = sbr.rel (%p212) target = $region20
        $region19: #{_batched_path_loss_impl.1} parent=11 // pred_region
          _
        $region20: #{_batched_path_loss_impl.1} parent=11 // pred_fallthru
          _
      $region12: #{_batched_path_loss_impl.1} parent=5 // pred_fallthru
        _
      %p215 = scmp.lt.s32.totalorder %s14, 2
      // Predicated region
      $region21: #{_batched_path_loss_impl.1} parent=5 // pred_check
        %p216 = pneg %p215
      $region22: #{_batched_path_loss_impl.1} parent=5 // pred_check_branch
        %218 = sbr.rel (%p216) target = $region24
      $region23: #{_batched_path_loss_impl.1} parent=5 // pred_region
        // Predicated region
        $region25: #{_batched_path_loss_impl.1} parent=23 // pred_check
          %p219 = pneg %p76
        $region26: #{_batched_path_loss_impl.1} parent=23 // pred_check_branch
          %221 = sbr.rel (%p219) target = $region28
        $region27: #{_batched_path_loss_impl.1} parent=23 // pred_region
          %p222 = scmp.lt.s32.totalorder %s14, 1
          %s223 = scalar_select %p222, %s14, 1
          %s224 = scalar_lea.vmem %s2, %s223
        $region28: #{_batched_path_loss_impl.1} parent=23 // pred_fallthru
          _
        // Predicated region
        $region29: #{_batched_path_loss_impl.1} parent=23 // pred_check
          %p225 = pneg %p102
        $region30: #{_batched_path_loss_impl.1} parent=23 // pred_check_branch
          %227 = sbr.rel (%p225) target = $region32
        $region31: #{_batched_path_loss_impl.1} parent=23 // pred_region
          %p228 = scmp.lt.s32.totalorder %s14, 1
          %s229 = scalar_select %p228, %s14, 1
          %s230 = scalar_lea.vmem %s3, %s229
        $region32: #{_batched_path_loss_impl.1} parent=23 // pred_fallthru
          _
        // Predicated region
        $region33: #{_batched_path_loss_impl.1} parent=23 // pred_check
          %p231 = pneg %p128
        $region34: #{_batched_path_loss_impl.1} parent=23 // pred_check_branch
          %233 = sbr.rel (%p231) target = $region36
        $region35: #{_batched_path_loss_impl.1} parent=23 // pred_region
          %p234 = scmp.lt.s32.totalorder %s14, 1
          %s235 = scalar_select %p234, %s14, 1
          %s236 = smul.addr %s235, 8
          %s237 = scalar_lea.vmem %s4, %s236
        $region36: #{_batched_path_loss_impl.1} parent=23 // pred_fallthru
          _
        // Predicated region
        $region37: #{_batched_path_loss_impl.1} parent=23 // pred_check
          %p238 = pneg %p154
        $region38: #{_batched_path_loss_impl.1} parent=23 // pred_check_branch
          %240 = sbr.rel (%p238) target = $region40
        $region39: #{_batched_path_loss_impl.1} parent=23 // pred_region
          %p241 = scmp.lt.s32.totalorder %s14, 1
          %s242 = scalar_select %p241, %s14, 1
          %s243 = smul.addr %s242, 8
          %s244 = scalar_lea.vmem %s5, %s243
        $region40: #{_batched_path_loss_impl.1} parent=23 // pred_fallthru
          _
      $region24: #{_batched_path_loss_impl.1} parent=5 // pred_fallthru
        _
      %p245 = scmp.le.s32.totalorder 1, %s14
      %p246 = scmp.lt.s32.totalorder %s14, 3
      %p247 = pnand %p245, %p246
      %p248 = pneg %p247
      // Predicated region
      $region41: #{_batched_path_loss_impl.1} parent=5 // pred_check
        _
      $region42: #{_batched_path_loss_impl.1} parent=5 // pred_check_branch
        %250 = sbr.rel (%p247) target = $region44
      $region43: #{_batched_path_loss_impl.1} parent=5 // pred_region
        %s251 = ssub.s32 %s14, 1
        // Predicated region
        $region45: #{_batched_path_loss_impl.1} parent=43 // pred_check
          %p252 = pneg %p35
        $region46: #{_batched_path_loss_impl.1} parent=43 // pred_check_branch
          %254 = sbr.rel (%p252) target = $region48
        $region47: #{_batched_path_loss_impl.1} parent=43 // pred_region
          %255 = dma.done [#allocation4], 16
        $region48: #{_batched_path_loss_impl.1} parent=43 // pred_fallthru
          _
        %256 = sfence
        %p257 = pneg %p35
        %p258 = pneg %p32
        %p259 = pneg %p56
        %p260 = pneg %p53
        %p261 = scmp.lt.s32.totalorder %s19, 1
        %s262 = scalar_select %p261, %s19, 1
        %s263 = scalar_lea.vmem %s2, %s262
        %p264 = pneg %p82
        %p265 = pneg %p79
        %p266 = scmp.lt.s32.totalorder %s19, 1
        %s267 = scalar_select %p266, %s19, 1
        %s268 = scalar_lea.vmem %s3, %s267
        %p269 = pneg %p108
        %p270 = pneg %p105
        %p271 = scmp.lt.s32.totalorder %s19, 1
        %s272 = scalar_select %p271, %s19, 1
        %s273 = smul.addr %s272, 8
        %s274 = scalar_lea.vmem %s4, %s273
        %p275 = pneg %p134
        %p276 = pneg %p131
        %p277 = scmp.lt.s32.totalorder %s19, 1
        %s278 = scalar_select %p277, %s19, 1
        %s279 = smul.addr %s278, 8
        %s280 = scalar_lea.vmem %s5, %s279
        %p281 = pneg %p160
        %p282 = pneg %p157
        %p283 = pneg %p186
        %p284 = pneg %p183
        %p285 = scmp.lt.s32.totalorder %s19, 1
        %s286 = scalar_select %p285, %s19, 1
        %s287 = scalar_lea.vmem %s6, %s286
        %p288 = scmp.lt.s32.totalorder %s19, 1
        %s289 = scalar_select %p288, %s19, 1
        %s290 = scalar_lea.vmem %s2, %s289
        %p291 = scmp.lt.s32.totalorder %s19, 1
        %s292 = scalar_select %p291, %s19, 1
        %s293 = scalar_lea.vmem %s3, %s292
        %p294 = scmp.lt.s32.totalorder %s19, 1
        %s295 = scalar_select %p294, %s19, 1
        %s296 = smul.addr %s295, 8
        %s297 = scalar_lea.vmem %s4, %s296
        %p298 = scmp.lt.s32.totalorder %s19, 1
        %s299 = scalar_select %p298, %s19, 1
        %s300 = smul.addr %s299, 8
        %s301 = scalar_lea.vmem %s5, %s300
        %p302 = scmp.lt.s32.totalorder %s19, 1
        %s303 = scalar_select %p302, %s19, 1
        %s304 = scalar_lea.vmem %s6, %s303
        %v305 = vld [vmem:[%s297] sm:$0xff]
        %v306 = vld [vmem:[%s290] sm:$0x1]
        %v308 = vlaneseq
        %v309 = vshrl.u32 %v308, 7
        %v310 = vsub.s32 0, %v309
        %v311 = vrot.slane %v306, %v310
        %v313 = vsub.f32 %v311, %v305
        %v314 = vld [vmem:[%s293] sm:$0x1]
        %v316 = vlaneseq
        %v317 = vshrl.u32 %v316, 7
        %v318 = vsub.s32 0, %v317
        %v319 = vrot.slane %v314, %v318
        %v321 = vsub.f32 %v319, %v305
        %v322 = vand.u32 2147483647, %v313
        %323 = vadd.xlane.f32.xlu0 %v322
        %v324 = vpop.xlane.xlu0 %323
        %v325 = vand.u32 2147483647, %v321
        %326 = vadd.xlane.f32.xlu0 %v325
        %v327 = vpop.xlane.xlu0 %326
        %s328 = sld [smem:[#allocation2]]
        %v329 = vld [vmem:[%s301] sm:$0xff]
        %v330 = vmul.f32 %v329, %v324
        %v331 = vstv %s328
        %v332 = vadd.f32 %v331, %v330
        %v333 = vsub.f32 %v332, %v327
        %v334 = vlaneseq
        %v335 = vshrl.u32 %v334, 7
        %s336 = sld [smem:[#allocation3 + %s19]]
        %v337 = vstv %s336
        %vm338 = vcmp.lt.s32.totalorder %v335, %v337
        %v339 = vsel %vm338, 1, 0
        %v340 = vcvt.s32.f32 %v339
        %v341 = vmax.f32 %v333, 0.0
        %v342 = vmul.f32 %v340, %v341
        %vm343 = vcmask 7168
        %v344 = vsel %vm343, %v342, 0.0
        %345 = vadd.xlane.f32.xlu0 %v344
        %v346 = vpop.xlane.xlu0 %345
        %v347 = vrot.slane %v346, 4
        %v348 = vadd.f32 %v346, %v347
        %v349 = vrot.slane %v348, 2
        %v350 = vadd.f32 %v348, %v349
        %v351 = vrot.slane %v350, 1
        %v352 = vadd.f32 %v350, %v351
        %s353 = vtos %v352
        %v354 = vstv %s353
        %355 = vst [vmem:[%s304] sm:$0x1] %v354
        %p356 = scmp.lt.s32.totalorder %s19, 1
        %s357 = scalar_select %p356, %s19, 1
        %s358 = scalar_lea.vmem %s6, %s357
        // Predicated region
        $region49: #{_batched_path_loss_impl.1} parent=43 // pred_check
          %p359 = pneg %p183
        $region50: #{_batched_path_loss_impl.1} parent=43 // pred_check_branch
          %361 = sbr.rel (%p359) target = $region52
        $region51: #{_batched_path_loss_impl.1} parent=43 // pred_region
          _
        $region52: #{_batched_path_loss_impl.1} parent=43 // pred_fallthru
          _
      $region44: #{_batched_path_loss_impl.1} parent=5 // pred_fallthru
        _
      %p362 = scmp.le.s32.totalorder 2, %s14
      // Predicated region
      $region53: #{_batched_path_loss_impl.1} parent=5 // pred_check
        %p363 = pneg %p362
      $region54: #{_batched_path_loss_impl.1} parent=5 // pred_check_branch
        %365 = sbr.rel (%p363) target = $region56
      $region55: #{_batched_path_loss_impl.1} parent=5 // pred_region
        %s366 = ssub.s32 %s14, 2
        // Predicated region
        $region57: #{_batched_path_loss_impl.1} parent=55 // pred_check
          %p367 = pneg %p189
        $region58: #{_batched_path_loss_impl.1} parent=55 // pred_check_branch
          %369 = sbr.rel (%p367) target = $region60
        $region59: #{_batched_path_loss_impl.1} parent=55 // pred_region
          %p370 = scmp.lt.s32.totalorder %s20, 1
          %s371 = scalar_select %p370, %s20, 1
          %s372 = scalar_lea.vmem %s6, %s371
        $region60: #{_batched_path_loss_impl.1} parent=55 // pred_fallthru
          _
      $region56: #{_batched_path_loss_impl.1} parent=5 // pred_fallthru
        _
    $region6: #{_batched_path_loss_impl.1} parent=1 // loop_footer
      %s18 = sadd.s32 1, %s14
    $region7: #{_batched_path_loss_impl.1} parent=1 // loop_footer_branch
      %13 = sbr.rel target = $region3
    $region8: #{_batched_path_loss_impl.1} parent=1 // loop_exit
      _
    %373 = vsyncpa [#allocation4], 1
    %s374 = scalar_lea.sflag [#allocation4], 1
    %375 = vsyncpa %s374, 1

</llo_original>
